<compile_context>
chip_gen: v7x
topology: tpu7x:2x2x1
jax: 0.10.0
libtpu: 0.0.40
codegen_flags: <defaults>
</compile_context>

<pallas_src>
import jax
import jax.numpy as jnp
from jax.experimental import pallas as pl
from jax.experimental.pallas import tpu as pltpu


def _vq_kernel(z_ref, emb_ref, ehsq_ref, zvq_ref, idx_ref, err_ref):
    z = z_ref[0]                      # (D, tT) f32, time on lanes
    e = emb_ref[...]                  # (K, D)  f32, resident codebook
    e_hsq = ehsq_ref[...]             # (K, 1)  f32, 0.5*||e||^2 (hoisted to wrapper)
    K = e.shape[0]

    # cross[k, t] = sum_d e[k, d] * z[d, t]                               (MXU)
    cross = jax.lax.dot_general(
        e, z, (((1,), (0,)), ((), ())),
        preferred_element_type=jnp.float32)                               # (K, tT)

    # argmin_k(||z||^2 + ||e_k||^2 - 2 z.e_k) == argmin_k(0.5||e_k||^2 - z.e_k)
    d = e_hsq - cross                                                     # (K, tT)

    # first-occurrence argmin over the codebook (sublane) axis, matching torch.argmin
    d_min = jnp.min(d, axis=0, keepdims=True)                             # (1, tT)
    iota = jax.lax.broadcasted_iota(jnp.int32, d.shape, 0)                # (K, tT)
    idx = jnp.min(jnp.where(d <= d_min, iota, K), axis=0, keepdims=True)  # (1, tT)
    onehot = (iota == idx).astype(jnp.float32)                            # (K, tT)

    # gather codebook rows: z_vq[d, t] = sum_k e[k, d] * onehot[k, t]     (MXU)
    z_vq = jax.lax.dot_general(
        e, onehot, (((0,), (0,)), ((), ())),
        preferred_element_type=jnp.float32)                               # (D, tT)

    zvq_ref[...] = z_vq[None, :, :].astype(zvq_ref.dtype)
    idx_ref[...] = idx[None, :, :].astype(jnp.int32)

    # fused per-frame MSE partials (z and z_vq are both already in VMEM)
    diff = z_vq - z
    err_ref[...] = jnp.sum(diff * diff, axis=0, keepdims=True)[None, :, :]


def _pick_tile_t(B, T, target=2048, min_steps=8):
    """Time tile: a multiple of 128 that divides T (lane-dense, no partial tiles),
    large enough to amortize the ~0.35us per-step cost but keeping >=~8 grid steps
    so v7x's two TensorCores and the pipeline stay fed."""
    if T % 128 != 0:
        # Full-extent block along T (always legal).  Fine for moderate T.
        return T
    tT = min(target, T)
    tT = (tT // 128) * 128
    while T % tT != 0:
        tT -= 128
    while (tT > 128 and B * (T // tT) < min_steps
           and (tT // 2) % 128 == 0 and T % (tT // 2) == 0):
        tT //= 2
    return tT


def ema_vq_forward(z, embeddings, *, reduction="frame_mean", time_last=True,
                   tile_t=2048):
    """Eval-mode forward of EMAVectorQuantizer.

    z: (B, D, T) if time_last else (B, T, D)
    embeddings: (z_num, z_dim)
    Returns (z_vq, z_qut_loss, z_enc_loss, update_detail, encoding_idx).
    """
    if not time_last:
        z_vq, ql, el, det, idx = ema_vq_forward(
            jnp.transpose(z, (0, 2, 1)), embeddings,
            reduction=reduction, time_last=True, tile_t=tile_t)
        return jnp.transpose(z_vq, (0, 2, 1)), ql, el, det, idx

    B, D, T = z.shape
    K, D_e = embeddings.shape
    assert D_e == D, f"z_dim mismatch: {D_e} vs {D}"

    tT = _pick_tile_t(B, T, target=tile_t)
    nt = T // tT

    z_f32 = z.astype(jnp.float32)
    emb_f32 = embeddings.astype(jnp.float32)
    # hoisted: 0.5 * ||e||^2  (the only codebook-norm term the argmin needs)
    e_hsq = 0.5 * jnp.sum(emb_f32 * emb_f32, axis=1, keepdims=True)       # (K, 1)

    z_vq, idx3, err3 = pl.pallas_call(
        _vq_kernel,
        out_shape=(
            jax.ShapeDtypeStruct((B, D, T), jnp.float32),   # z_vq, native layout
            jax.ShapeDtypeStruct((B, 1, T), jnp.int32),     # encoding_idx, lane-dense
            jax.ShapeDtypeStruct((B, 1, T), jnp.float32),   # per-frame MSE partials
        ),
        grid_spec=pltpu.PrefetchScalarGridSpec(
            num_scalar_prefetch=0,
            grid=(B, nt),
            in_specs=[
                pl.BlockSpec((1, D, tT), lambda b, t: (b, 0, t)),   # z slab
                pl.BlockSpec((K, D), lambda b, t: (0, 0)),          # codebook (resident)
                pl.BlockSpec((K, 1), lambda b, t: (0, 0)),          # 0.5*||e||^2
            ],
            out_specs=[
                pl.BlockSpec((1, D, tT), lambda b, t: (b, 0, t)),   # z_vq slab
                pl.BlockSpec((1, 1, tT), lambda b, t: (b, 0, t)),   # idx row
                pl.BlockSpec((1, 1, tT), lambda b, t: (b, 0, t)),   # err row
            ],
        ),
        compiler_params=pltpu.CompilerParams(
            dimension_semantics=("parallel", "parallel"),   # no cross-iteration state
            vmem_limit_bytes=48 * 1024 * 1024,              # under v7x 64 MiB ceiling
        ),
    )(z_f32, emb_f32, e_hsq)

    # tiny reduction over per-frame partials (N*4 bytes, ~1/D of the z traffic)
    loss_sum = jnp.sum(err3)
    if reduction == "sum":
        z_enc_loss = loss_sum
    elif reduction == "mean":
        z_enc_loss = loss_sum / (B * T * D)
    elif reduction == "batch_mean":
        z_enc_loss = loss_sum / B
    elif reduction == "frame_mean":
        z_enc_loss = loss_sum / (B * T)
    else:
        raise NotImplementedError(f"reduction={reduction}")

    z_qut_loss = jnp.float32(0.0)
    update_detail = {}
    encoding_idx = idx3.reshape(B, T)
    return z_vq.astype(z.dtype), z_qut_loss, z_enc_loss, update_detail, encoding_idx


def _reference(z, embeddings, reduction="frame_mean"):
    """Pure-JAX reference mirroring the PyTorch forward (eval mode, time_last=True)."""
    B, D, T = z.shape
    zf = jnp.transpose(z, (0, 2, 1)).reshape(-1, D)
    d = (jnp.sum(zf ** 2, axis=1, keepdims=True)
         + jnp.sum(embeddings ** 2, axis=1)
         - 2.0 * zf @ embeddings.T)
    idx = jnp.argmin(d, axis=1)
    z_vq = embeddings[idx]
    loss = jnp.sum((z_vq - zf) ** 2)
    if reduction == "frame_mean":
        loss = loss / (B * T)
    z_vq = jnp.transpose(z_vq.reshape(B, T, D), (0, 2, 1))
    return z_vq, loss, idx.reshape(B, T)


if __name__ == "__main__":
    # Module config: z_num=64, z_dim=32, mu=0.99, reduction='frame_mean'
    z_num, z_dim = 64, 32
    B, T = 2, 16

    key = jax.random.PRNGKey(0)
    k_z, k_emb = jax.random.split(key)
    z = jax.random.normal(k_z, (B, z_dim, T), dtype=jnp.float32)          # (B, D, T)
    # Deterministic synthetic codebook (stands in for the EMA-learned buffer).
    embeddings = jax.random.normal(k_emb, (z_num, z_dim), dtype=jnp.float32)

    z_vq, z_qut_loss, z_enc_loss, update_detail, idx = ema_vq_forward(
        z, embeddings, reduction="frame_mean", time_last=True)
    jax.block_until_ready((z_vq, z_enc_loss, idx))

    # correctness check against pure-JAX reference
    z_vq_ref, loss_ref, idx_ref = _reference(z, embeddings)
    assert jnp.array_equal(idx, idx_ref), "encoding indices mismatch"
    assert jnp.allclose(z_vq, z_vq_ref, atol=1e-5, rtol=1e-5), "z_vq mismatch"
    assert jnp.allclose(z_enc_loss, loss_ref, atol=1e-4, rtol=1e-4), "loss mismatch"

    print("KERNEL_OK")
</pallas_src>

<mosaic_0001>
module attributes {stable_mosaic.version = 11 : i64} {
  func.func @_vq_kernel(%arg0: i32, %arg1: i32, %arg2: memref<1x32x16xf32, #tpu.memory_space<vmem>>, %arg3: memref<64x32xf32, #tpu.memory_space<vmem>>, %arg4: memref<64x1xf32, #tpu.memory_space<vmem>>, %arg5: memref<1x32x16xf32, #tpu.memory_space<vmem>>, %arg6: memref<1x1x16xi32, #tpu.memory_space<vmem>>, %arg7: memref<1x1x16xf32, #tpu.memory_space<vmem>>) attributes {dimension_semantics = [#tpu.dimension_semantics<parallel>, #tpu.dimension_semantics<parallel>], iteration_bounds = array<i64: 2, 1>, scalar_prefetch = 0 : i64, scratch_operands = 0 : i64, tpu.core_type = #tpu.core_type<tc>, window_params = [{transform_indices = @transform_0, window_bounds = array<i64: 1, 32, 16>}, {pipeline_mode = #tpu.pipeline_mode<synchronous>, transform_indices = @transform_1, window_bounds = array<i64: 64, 32>}, {pipeline_mode = #tpu.pipeline_mode<synchronous>, transform_indices = @transform_2, window_bounds = array<i64: 64, 1>}, {transform_indices = @transform_3, window_bounds = array<i64: 1, 32, 16>}, {transform_indices = @transform_4, window_bounds = array<i64: 1, 1, 16>}, {transform_indices = @transform_5, window_bounds = array<i64: 1, 1, 16>}]} {
    %c0 = arith.constant 0 : index
    %c0_0 = arith.constant 0 : index
    %c0_1 = arith.constant 0 : index
    %0 = vector.load %arg2[%c0, %c0_0, %c0_1] : memref<1x32x16xf32, #tpu.memory_space<vmem>>, vector<1x32x16xf32>
    %1 = vector.shape_cast %0 : vector<1x32x16xf32> to vector<32x16xf32>
    %c0_2 = arith.constant 0 : index
    %c0_3 = arith.constant 0 : index
    %2 = vector.load %arg3[%c0_2, %c0_3] : memref<64x32xf32, #tpu.memory_space<vmem>>, vector<64x32xf32>
    %c0_4 = arith.constant 0 : index
    %c0_5 = arith.constant 0 : index
    %3 = vector.load %arg4[%c0_4, %c0_5] : memref<64x1xf32, #tpu.memory_space<vmem>>, vector<64x1xf32>
    %cst = arith.constant dense<0.000000e+00> : vector<64x16xf32>
    %4 = tpu.matmul %2, %1, %cst {dimension_numbers = #tpu.dot_dimension_numbers<[1], [0], [0], [1], [0, 0, 1, 1], [], []>} : vector<64x32xf32>, vector<32x16xf32>, vector<64x16xf32> -> vector<64x16xf32>
    %5 = vector.broadcast %3 : vector<64x1xf32> to vector<64x16xf32>
    %6 = arith.subf %5, %4 : vector<64x16xf32>
    %cst_6 = arith.constant dense<0x7F800000> : vector<16xf32>
    %7 = vector.multi_reduction <minimumf>, %6, %cst_6 [0] : vector<64x16xf32> to vector<16xf32>
    %8 = vector.shape_cast %7 : vector<16xf32> to vector<1x16xf32>
    %9 = tpu.iota {dimensions = array<i32: 0>} : vector<64x16xi32>
    %10 = vector.broadcast %8 : vector<1x16xf32> to vector<64x16xf32>
    %11 = arith.cmpf ole, %6, %10 : vector<64x16xf32>
    %c64_i32 = arith.constant 64 : i32
    %12 = vector.broadcast %c64_i32 : i32 to vector<64x16xi32>
    %13 = arith.select %11, %9, %12 : vector<64x16xi1>, vector<64x16xi32>
    %cst_7 = arith.constant dense<2147483647> : vector<16xi32>
    %14 = vector.multi_reduction <minsi>, %13, %cst_7 [0] : vector<64x16xi32> to vector<16xi32>
    %15 = vector.shape_cast %14 : vector<16xi32> to vector<1x16xi32>
    %16 = vector.broadcast %15 : vector<1x16xi32> to vector<64x16xi32>
    %17 = arith.cmpi eq, %9, %16 : vector<64x16xi32>
    %18 = arith.extui %17 : vector<64x16xi1> to vector<64x16xi32>
    %19 = arith.sitofp %18 : vector<64x16xi32> to vector<64x16xf32>
    %cst_8 = arith.constant dense<0.000000e+00> : vector<32x16xf32>
    %20 = tpu.matmul %2, %19, %cst_8 {dimension_numbers = #tpu.dot_dimension_numbers<[0], [0], [1], [1], [0, 1, 1, 1], [], []>} : vector<64x32xf32>, vector<64x16xf32>, vector<32x16xf32> -> vector<32x16xf32>
    %21 = vector.shape_cast %20 : vector<32x16xf32> to vector<1x32x16xf32>
    %c0_9 = arith.constant 0 : index
    %c0_10 = arith.constant 0 : index
    %c0_11 = arith.constant 0 : index
    %22 = vector.load %arg5[%c0_9, %c0_10, %c0_11] : memref<1x32x16xf32, #tpu.memory_space<vmem>>, vector<1x32x16xf32>
    tpu.vector_store %arg5[%c0_9, %c0_10, %c0_11], %21 {strides = array<i32>} : memref<1x32x16xf32, #tpu.memory_space<vmem>>, vector<1x32x16xf32>,
    %23 = vector.shape_cast %15 : vector<1x16xi32> to vector<1x1x16xi32>
    %c0_12 = arith.constant 0 : index
    %c0_13 = arith.constant 0 : index
    %c0_14 = arith.constant 0 : index
    %24 = vector.load %arg6[%c0_12, %c0_13, %c0_14] : memref<1x1x16xi32, #tpu.memory_space<vmem>>, vector<1x1x16xi32>
    tpu.vector_store %arg6[%c0_12, %c0_13, %c0_14], %23 {strides = array<i32>} : memref<1x1x16xi32, #tpu.memory_space<vmem>>, vector<1x1x16xi32>,
    %25 = arith.subf %20, %1 : vector<32x16xf32>
    %26 = arith.mulf %25, %25 : vector<32x16xf32>
    %cst_15 = arith.constant dense<0.000000e+00> : vector<16xf32>
    %27 = vector.multi_reduction <add>, %26, %cst_15 [0] : vector<32x16xf32> to vector<16xf32>
    %28 = vector.shape_cast %27 : vector<16xf32> to vector<1x16xf32>
    %29 = vector.shape_cast %28 : vector<1x16xf32> to vector<1x1x16xf32>
    %c0_16 = arith.constant 0 : index
    %c0_17 = arith.constant 0 : index
    %c0_18 = arith.constant 0 : index
    %30 = vector.load %arg7[%c0_16, %c0_17, %c0_18] : memref<1x1x16xf32, #tpu.memory_space<vmem>>, vector<1x1x16xf32>
    tpu.vector_store %arg7[%c0_16, %c0_17, %c0_18], %29 {strides = array<i32>} : memref<1x1x16xf32, #tpu.memory_space<vmem>>, vector<1x1x16xf32>,
    return
  }
  func.func @transform_0(%arg0: i32, %arg1: i32) -> (i32, i32, i32) {
    %c0_i32 = arith.constant 0 : i32
    %c0_i32_0 = arith.constant 0 : i32
    return %arg0, %c0_i32, %arg1 : i32, i32, i32
  }
  func.func @transform_1(%arg0: i32, %arg1: i32) -> (i32, i32) {
    %c0_i32 = arith.constant 0 : i32
    %c0_i32_0 = arith.constant 0 : i32
    %c0_i32_1 = arith.constant 0 : i32
    return %c0_i32, %c0_i32_0 : i32, i32
  }
  func.func @transform_2(%arg0: i32, %arg1: i32) -> (i32, i32) {
    %c0_i32 = arith.constant 0 : i32
    %c0_i32_0 = arith.constant 0 : i32
    %c0_i32_1 = arith.constant 0 : i32
    return %c0_i32, %c0_i32_0 : i32, i32
  }
  func.func @transform_3(%arg0: i32, %arg1: i32) -> (i32, i32, i32) {
    %c0_i32 = arith.constant 0 : i32
    %c0_i32_0 = arith.constant 0 : i32
    return %arg0, %c0_i32, %arg1 : i32, i32, i32
  }
  func.func @transform_4(%arg0: i32, %arg1: i32) -> (i32, i32, i32) {
    %c0_i32 = arith.constant 0 : i32
    %c0_i32_0 = arith.constant 0 : i32
    return %arg0, %c0_i32, %arg1 : i32, i32, i32
  }
  func.func @transform_5(%arg0: i32, %arg1: i32) -> (i32, i32, i32) {
    %c0_i32 = arith.constant 0 : i32
    %c0_i32_0 = arith.constant 0 : i32
    return %arg0, %c0_i32, %arg1 : i32, i32, i32
  }
}

</mosaic_0001>

<llo_original>
// kernel: tpu_custom_call.1
$region0: #{tpu_custom_call.1}
  #allocation0 [shape = 'u32[]', space=smem, size = 0x4, offset = 0x4, fixed_abs, tag = 'smem constant byte address 0x4 - core index']
  #allocation1 [shape = 'u32[144,128]{1,0:T(1,128)}', space=vmem, size = 0x12000, scoped, tag = 'internal scratch']
  %s0 = inlined_call_operand.vmem [shape: f32[2,32,16], index: 0, kind: input, shape index: {}]
  %s1 = inlined_call_operand.vmem [shape: f32[64,32], index: 1, kind: input, shape index: {}]
  %s2 = inlined_call_operand.vmem [shape: f32[64,1], index: 2, kind: input, shape index: {}]
  %s3 = inlined_call_operand.vmem [shape: f32[2,32,16], index: 3, kind: output, shape index: {0}]
  %s4 = inlined_call_operand.hbm [shape: s32[2,1,16], index: 4, kind: output, shape index: {1}]
  %s5 = inlined_call_operand.hbm [shape: f32[2,1,16], index: 5, kind: output, shape index: {2}]
  %6 = xla_tuple %s3, %s4, %s5
  %s7 = sld [smem:[#allocation0]]
  $region61: #{tpu_custom_call.1} parent=0
    _
  %s9 = ssub.s32 1, %s7
  %s10 = scalar_select 0, %s9, %s7
  $region1: #{tpu_custom_call.1} parent=0
    #allocation2 [shape = 'u8[1024]{0}', space=vmem, size = 0x400, scoped, tag = 'output window, operand 1']
    #allocation3 [shape = 's32[2]{0}', space=sflag, size = 0x8, scoped, tag = 'scoped memory for tpu_custom_call.1']
    #allocation4 [shape = 'u8[1024]{0}', space=vmem, size = 0x400, scoped, tag = 'output window, operand 2']
    #allocation5 [shape = 's32[2]{0}', space=sflag, size = 0x8, scoped, tag = 'scoped memory for tpu_custom_call.1']
    %11 = vsyncpa [#allocation3], 0
    %s12 = scalar_lea.sflag [#allocation3], 1
    %13 = vsyncpa %s12, 0
    %14 = vsyncpa [#allocation5], 0
    %s15 = scalar_lea.sflag [#allocation5], 1
    %16 = vsyncpa %s15, 0
    loop: start=0, step=1, limit=4
    $region2: #{tpu_custom_call.1} parent=1 // loop_pre_header
      _
    $region3: #{tpu_custom_call.1} parent=1 // loop_header
      %s18 = sphi 0, %s22
      %p19 = scmp.ge.s32.totalorder %s18, 4
      %s25 = sphi 0, %s37
      %s26 = sphi 0, %s33
      %s27 = sphi 0, %s25
      %s28 = sphi 0, %s26
      %s29 = sphi 0, %s27
      %s30 = sphi 0, %s28
      %s42 = sphi 0, %s44
      %s45 = sphi 0, %s42
      %s46 = sphi 0, %s45
      %s62 = sphi 0, %s46
      %s66 = sphi 0, %s66
      %s68 = sphi 0, %s66
      %s69 = sphi 0, %s68
      %s83 = sphi 0, %s69
      %s87 = sphi 0, %s87
      %s89 = sphi 0, %s87
      %s90 = sphi 0, %s89
      %s104 = sphi 0, %s90
      %s112 = sphi 0, %s114
      %s115 = sphi 0, %s112
      %s116 = sphi 0, %s115
      %s132 = sphi 0, %s116
      %s140 = sphi 0, %s142
      %s143 = sphi 0, %s140
      %s144 = sphi 0, %s143
      %s160 = sphi 0, %s144
      %s168 = sphi 0, %s170
      %s171 = sphi 0, %s168
      %s172 = sphi 0, %s171
      %s188 = sphi 0, %s172
    $region4: #{tpu_custom_call.1} parent=1 // loop_header_branch
      %21 = sbr.rel (%p19) target = $region8
    $region5: #{tpu_custom_call.1} parent=1 // loop_body
      %s23 = ssub.s32 %s18, 1
      %s24 = ssub.s32 %s18, 2
      %s31 = sadd.s32 1, %s26
      %p32 = scmp.ge.s32.totalorder %s31, 1
      %s33 = scalar_select %p32, 0, %s31
      %s34 = sadd.s32 1, %s25
      %s35 = scalar_select %p32, %s34, %s25
      %p36 = scmp.ge.s32.totalorder %s35, 2
      %s37 = scalar_select %p36, 0, %s35
      %s38 = ssub.s32 %s25, %s37
      %s39 = ssub.s32 %s26, %s33
      %s40 = sor.u32 %s38, %s39
      %p41 = scmp.eq.s32.totalorder %s40, 0
      %s43 = sadd.s32 %s42, 1
      %s44 = scalar_select %p41, %s42, %s43
      %p47 = pneg %p41
      %p48 = scmp.eq.s32.totalorder %s18, 1
      %p49 = por %p47, %p48
      %p50 = scmp.ne.s32.totalorder %s42, %s45
      %p51 = scmp.eq.s32.totalorder %s18, 0
      %p52 = por %p50, %p51
      %p53 = scmp.ne.s32.totalorder %s42, %s45
      %p54 = scmp.eq.s32.totalorder %s23, 1
      %p55 = por %p53, %p54
      %p56 = scmp.ne.s32.totalorder %s45, %s46
      %p57 = scmp.eq.s32.totalorder %s23, 0
      %p58 = por %p56, %p57
      %p59 = scmp.ne.s32.totalorder %s45, %s46
      %p60 = scmp.eq.s32.totalorder %s24, 1
      %p61 = por %p59, %p60
      %p63 = scmp.ne.s32.totalorder %s46, %s62
      %p64 = scmp.eq.s32.totalorder %s24, 0
      %p65 = por %p63, %p64
      %s67 = sadd.s32 %s66, 1
      %p70 = scmp.eq.s32.totalorder %s18, 1
      %p71 = scmp.ne.s32.totalorder %s66, %s68
      %p72 = scmp.eq.s32.totalorder %s18, 0
      %p73 = por %p71, %p72
      %p74 = scmp.ne.s32.totalorder %s66, %s68
      %p75 = scmp.eq.s32.totalorder %s23, 1
      %p76 = por %p74, %p75
      %p77 = scmp.ne.s32.totalorder %s68, %s69
      %p78 = scmp.eq.s32.totalorder %s23, 0
      %p79 = por %p77, %p78
      %p80 = scmp.ne.s32.totalorder %s68, %s69
      %p81 = scmp.eq.s32.totalorder %s24, 1
      %p82 = por %p80, %p81
      %p84 = scmp.ne.s32.totalorder %s69, %s83
      %p85 = scmp.eq.s32.totalorder %s24, 0
      %p86 = por %p84, %p85
      %s88 = sadd.s32 %s87, 1
      %p91 = scmp.eq.s32.totalorder %s18, 1
      %p92 = scmp.ne.s32.totalorder %s87, %s89
      %p93 = scmp.eq.s32.totalorder %s18, 0
      %p94 = por %p92, %p93
      %p95 = scmp.ne.s32.totalorder %s87, %s89
      %p96 = scmp.eq.s32.totalorder %s23, 1
      %p97 = por %p95, %p96
      %p98 = scmp.ne.s32.totalorder %s89, %s90
      %p99 = scmp.eq.s32.totalorder %s23, 0
      %p100 = por %p98, %p99
      %p101 = scmp.ne.s32.totalorder %s89, %s90
      %p102 = scmp.eq.s32.totalorder %s24, 1
      %p103 = por %p101, %p102
      %p105 = scmp.ne.s32.totalorder %s90, %s104
      %p106 = scmp.eq.s32.totalorder %s24, 0
      %p107 = por %p105, %p106
      %s108 = ssub.s32 %s25, %s37
      %s109 = ssub.s32 %s26, %s33
      %s110 = sor.u32 %s108, %s109
      %p111 = scmp.eq.s32.totalorder %s110, 0
      %s113 = sadd.s32 %s112, 1
      %s114 = scalar_select %p111, %s112, %s113
      %p117 = pneg %p111
      %p118 = scmp.eq.s32.totalorder %s18, 1
      %p119 = por %p117, %p118
      %p120 = scmp.ne.s32.totalorder %s112, %s115
      %p121 = scmp.eq.s32.totalorder %s18, 0
      %p122 = por %p120, %p121
      %p123 = scmp.ne.s32.totalorder %s112, %s115
      %p124 = scmp.eq.s32.totalorder %s23, 1
      %p125 = por %p123, %p124
      %p126 = scmp.ne.s32.totalorder %s115, %s116
      %p127 = scmp.eq.s32.totalorder %s23, 0
      %p128 = por %p126, %p127
      %p129 = scmp.ne.s32.totalorder %s115, %s116
      %p130 = scmp.eq.s32.totalorder %s24, 1
      %p131 = por %p129, %p130
      %p133 = scmp.ne.s32.totalorder %s116, %s132
      %p134 = scmp.eq.s32.totalorder %s24, 0
      %p135 = por %p133, %p134
      %s136 = ssub.s32 %s25, %s37
      %s137 = ssub.s32 %s26, %s33
      %s138 = sor.u32 %s136, %s137
      %p139 = scmp.eq.s32.totalorder %s138, 0
      %s141 = sadd.s32 %s140, 1
      %s142 = scalar_select %p139, %s140, %s141
      %p145 = pneg %p139
      %p146 = scmp.eq.s32.totalorder %s18, 1
      %p147 = por %p145, %p146
      %p148 = scmp.ne.s32.totalorder %s140, %s143
      %p149 = scmp.eq.s32.totalorder %s18, 0
      %p150 = por %p148, %p149
      %p151 = scmp.ne.s32.totalorder %s140, %s143
      %p152 = scmp.eq.s32.totalorder %s23, 1
      %p153 = por %p151, %p152
      %p154 = scmp.ne.s32.totalorder %s143, %s144
      %p155 = scmp.eq.s32.totalorder %s23, 0
      %p156 = por %p154, %p155
      %p157 = scmp.ne.s32.totalorder %s143, %s144
      %p158 = scmp.eq.s32.totalorder %s24, 1
      %p159 = por %p157, %p158
      %p161 = scmp.ne.s32.totalorder %s144, %s160
      %p162 = scmp.eq.s32.totalorder %s24, 0
      %p163 = por %p161, %p162
      %s164 = ssub.s32 %s25, %s37
      %s165 = ssub.s32 %s26, %s33
      %s166 = sor.u32 %s164, %s165
      %p167 = scmp.eq.s32.totalorder %s166, 0
      %s169 = sadd.s32 %s168, 1
      %s170 = scalar_select %p167, %s168, %s169
      %p173 = pneg %p167
      %p174 = scmp.eq.s32.totalorder %s18, 1
      %p175 = por %p173, %p174
      %p176 = scmp.ne.s32.totalorder %s168, %s171
      %p177 = scmp.eq.s32.totalorder %s18, 0
      %p178 = por %p176, %p177
      %p179 = scmp.ne.s32.totalorder %s168, %s171
      %p180 = scmp.eq.s32.totalorder %s23, 1
      %p181 = por %p179, %p180
      %p182 = scmp.ne.s32.totalorder %s171, %s172
      %p183 = scmp.eq.s32.totalorder %s23, 0
      %p184 = por %p182, %p183
      %p185 = scmp.ne.s32.totalorder %s171, %s172
      %p186 = scmp.eq.s32.totalorder %s24, 1
      %p187 = por %p185, %p186
      %p189 = scmp.ne.s32.totalorder %s172, %s188
      %p190 = scmp.eq.s32.totalorder %s24, 0
      %p191 = por %p189, %p190
      %p192 = scmp.le.s32.totalorder 1, %s18
      %p193 = scmp.lt.s32.totalorder %s18, 3
      %p194 = pnand %p192, %p193
      %p195 = pneg %p194
      // Predicated region
      $region9: #{tpu_custom_call.1} parent=5 // pred_check
        _
      $region10: #{tpu_custom_call.1} parent=5 // pred_check_branch
        %197 = sbr.rel (%p194) target = $region12
      $region11: #{tpu_custom_call.1} parent=5 // pred_region
        %s198 = ssub.s32 %s18, 1
        // Predicated region
        $region13: #{tpu_custom_call.1} parent=11 // pred_check
          %p199 = pneg %p79
        $region14: #{tpu_custom_call.1} parent=11 // pred_check_branch
          %201 = sbr.rel (%p199) target = $region16
        $region15: #{tpu_custom_call.1} parent=11 // pred_region
          _
        $region16: #{tpu_custom_call.1} parent=11 // pred_fallthru
          _
        // Predicated region
        $region17: #{tpu_custom_call.1} parent=11 // pred_check
          %p202 = pneg %p100
        $region18: #{tpu_custom_call.1} parent=11 // pred_check_branch
          %204 = sbr.rel (%p202) target = $region20
        $region19: #{tpu_custom_call.1} parent=11 // pred_region
          _
        $region20: #{tpu_custom_call.1} parent=11 // pred_fallthru
          _
      $region12: #{tpu_custom_call.1} parent=5 // pred_fallthru
        _
      %p205 = scmp.lt.s32.totalorder %s18, 2
      // Predicated region
      $region21: #{tpu_custom_call.1} parent=5 // pred_check
        %p206 = pneg %p205
      $region22: #{tpu_custom_call.1} parent=5 // pred_check_branch
        %208 = sbr.rel (%p206) target = $region24
      $region23: #{tpu_custom_call.1} parent=5 // pred_region
        // Predicated region
        $region25: #{tpu_custom_call.1} parent=23 // pred_check
          %p209 = pneg %p52
        $region26: #{tpu_custom_call.1} parent=23 // pred_check_branch
          %211 = sbr.rel (%p209) target = $region28
        $region27: #{tpu_custom_call.1} parent=23 // pred_region
          %p212 = scmp.lt.s32.totalorder %s25, 1
          %s213 = scalar_select %p212, %s25, 1
          %p214 = scmp.lt.s32.totalorder %s26, 0
          %s215 = scalar_select %p214, %s26, 0
          %s216 = smul.addr %s213, 4
          %s217 = sadd.s32 %s215, %s216
          %s218 = smul.addr %s217, 8
          %s219 = scalar_lea.vmem %s0, %s218
        $region28: #{tpu_custom_call.1} parent=23 // pred_fallthru
          _
      $region24: #{tpu_custom_call.1} parent=5 // pred_fallthru
        _
      %p220 = scmp.le.s32.totalorder 1, %s18
      %p221 = scmp.lt.s32.totalorder %s18, 3
      %p222 = pnand %p220, %p221
      %p223 = pneg %p222
      // Predicated region
      $region29: #{tpu_custom_call.1} parent=5 // pred_check
        _
      $region30: #{tpu_custom_call.1} parent=5 // pred_check_branch
        %225 = sbr.rel (%p222) target = $region32
      $region31: #{tpu_custom_call.1} parent=5 // pred_region
        %s226 = ssub.s32 %s18, 1
        %p227 = scmp.lt.s32.totalorder %s27, 1
        %s228 = scalar_select %p227, %s27, 1
        %p229 = scmp.lt.s32.totalorder %s28, 0
        %s230 = scalar_select %p229, %s28, 0
        %s231 = smul.addr %s228, 4
        %s232 = sadd.s32 %s230, %s231
        %s233 = smul.addr %s232, 8
        %s234 = scalar_lea.vmem %s0, %s233
        %p235 = pneg %p58
        %p236 = pneg %p55
        %p237 = pneg %p79
        %p238 = pneg %p76
        %p239 = pneg %p100
        %p240 = pneg %p97
        %p241 = pneg %p128
        %p242 = pneg %p125
        %p243 = scmp.lt.s32.totalorder %s27, 1
        %s244 = scalar_select %p243, %s27, 1
        %p245 = scmp.lt.s32.totalorder %s28, 0
        %s246 = scalar_select %p245, %s28, 0
        %s247 = smul.addr %s244, 4
        %s248 = sadd.s32 %s246, %s247
        %s249 = smul.addr %s248, 8
        %s250 = scalar_lea.vmem %s3, %s249
        %p251 = pneg %p156
        %p252 = pneg %p153
        %s253 = sand.u32 %s143, 1
        %s254 = scalar_lea.sflag [#allocation3], %s253
        %s255 = sand.u32 %s143, 1
        %s256 = scalar_lea.vmem [#allocation2], %s255
        %p257 = pneg %p184
        %p258 = pneg %p181
        %s259 = sand.u32 %s171, 1
        %s260 = scalar_lea.sflag [#allocation5], %s259
        %s261 = sand.u32 %s171, 1
        %s262 = scalar_lea.vmem [#allocation4], %s261
        %p263 = scmp.lt.s32.totalorder %s27, 1
        %s264 = scalar_select %p263, %s27, 1
        %p265 = scmp.lt.s32.totalorder %s28, 0
        %s266 = scalar_select %p265, %s28, 0
        %s267 = smul.addr %s264, 4
        %s268 = sadd.s32 %s266, %s267
        %s269 = smul.addr %s268, 8
        %s270 = scalar_lea.vmem %s0, %s269
        %p271 = scmp.lt.s32.totalorder %s27, 1
        %s272 = scalar_select %p271, %s27, 1
        %p273 = scmp.lt.s32.totalorder %s28, 0
        %s274 = scalar_select %p273, %s28, 0
        %s275 = smul.addr %s272, 4
        %s276 = sadd.s32 %s274, %s275
        %s277 = smul.addr %s276, 8
        %s278 = scalar_lea.vmem %s3, %s277
        %v279 = vld [vmem:[%s270] sm:$0xff]
        %v280 = vld [vmem:[%s270 + $0x8] sm:$0xff]
        %v281 = vld [vmem:[%s270 + $0x10] sm:$0xff]
        %v282 = vld [vmem:[%s270 + $0x18] sm:$0xff]
        %v283 = vld [vmem:[%s1] sm:$0xff]
        %v284 = vld [vmem:[%s1 + $0x8] sm:$0xff]
        %v285 = vld [vmem:[%s1 + $0x10] sm:$0xff]
        %v286 = vld [vmem:[%s1 + $0x18] sm:$0xff]
        %v287 = vld [vmem:[%s1 + $0x20] sm:$0xff]
        %v288 = vld [vmem:[%s1 + $0x28] sm:$0xff]
        %v289 = vld [vmem:[%s1 + $0x30] sm:$0xff]
        %v290 = vld [vmem:[%s1 + $0x38] sm:$0xff]
        %v291 = vld [vmem:[%s2] sm:$0xff]
        %v292 = vld [vmem:[%s2 + $0x8] sm:$0xff]
        %v293 = vld [vmem:[%s2 + $0x10] sm:$0xff]
        %v294 = vld [vmem:[%s2 + $0x18] sm:$0xff]
        %v295 = vld [vmem:[%s2 + $0x20] sm:$0xff]
        %v296 = vld [vmem:[%s2 + $0x28] sm:$0xff]
        %v297 = vld [vmem:[%s2 + $0x30] sm:$0xff]
        %v298 = vld [vmem:[%s2 + $0x38] sm:$0xff]
        %vm299 = vcmask 261120
        %v301 = vsel %vm299, %v283, 0
        %v304 = vsel %vm299, %v284, 0
        %v307 = vsel %vm299, %v285, 0
        %v310 = vsel %vm299, %v286, 0
        %v313 = vsel %vm299, %v287, 0
        %v316 = vsel %vm299, %v288, 0
        %v319 = vsel %vm299, %v289, 0
        %v322 = vsel %vm299, %v290, 0
        %324 = vmatprep.subr.mxu0 0.0
        %325 = vmatpush1.msra.mxu0 %v279
        %326 = vmatprep.subr.mxu0 0.0
        %327 = vmatpush1.msra.mxu0 %v280
        %328 = vmatprep.subr.mxu0 0.0
        %329 = vmatpush1.msra.mxu0 %v281
        %330 = vmatprep.subr.mxu0 0.0
        %331 = vmatpush1.msra.mxu0 %v282
        %332 = vmatprep.subr.mxu0 0.0
        %333 = vmatpush1.msra.mxu0 0.0
        %334 = vmatprep.subr.mxu0 0.0
        %335 = vmatpush1.msra.mxu0 0.0
        %336 = vmatprep.subr.mxu0 0.0
        %337 = vmatpush1.msra.mxu0 0.0
        %338 = vmatprep.subr.mxu0 0.0
        %339 = vmatpush1.msra.mxu0 0.0
        %340 = vmatprep.subr.mxu0 0.0
        %341 = vmatpush1.msra.mxu0 0.0
        %342 = vmatprep.subr.mxu0 0.0
        %343 = vmatpush1.msra.mxu0 0.0
        %344 = vmatprep.subr.mxu0 0.0
        %345 = vmatpush1.msra.mxu0 0.0
        %346 = vmatprep.subr.mxu0 0.0
        %347 = vmatpush1.msra.mxu0 0.0
        %348 = vmatprep.subr.mxu0 0.0
        %349 = vmatpush1.msra.mxu0 0.0
        %350 = vmatprep.subr.mxu0 0.0
        %351 = vmatpush1.msra.mxu0 0.0
        %352 = vmatprep.subr.mxu0 0.0
        %353 = vmatpush1.msra.mxu0 0.0
        %354 = vmatprep.subr.mxu0 0.0
        %355 = vmatpush1.msra.mxu0 0.0
        %356 = vmatprep.subr.mxu0 0.0
        %357 = vmatpush1.msra.mxu0 0.0
        %358 = vmatprep.subr.mxu0 0.0
        %359 = vmatpush1.msra.mxu0 0.0
        %360 = vmatprep.subr.mxu0 0.0
        %361 = vmatpush1.msra.mxu0 0.0
        %362 = vmatprep.subr.mxu0 0.0
        %363 = vmatpush1.msra.mxu0 0.0
        %364 = vmatprep.subr.mxu0 0.0
        %365 = vmatpush1.msra.mxu0 0.0
        %366 = vmatprep.subr.mxu0 0.0
        %367 = vmatpush1.msra.mxu0 0.0
        %368 = vmatprep.subr.mxu0 0.0
        %369 = vmatpush1.msra.mxu0 0.0
        %370 = vmatprep.subr.mxu0 0.0
        %371 = vmatpush1.msra.mxu0 0.0
        %372 = vmatprep.subr.mxu0 0.0
        %373 = vmatpush1.msra.mxu0 0.0
        %374 = vmatprep.subr.mxu0 0.0
        %375 = vmatpush1.msra.mxu0 0.0
        %376 = vmatprep.subr.mxu0 0.0
        %377 = vmatpush1.msra.mxu0 0.0
        %378 = vmatprep.subr.mxu0 0.0
        %379 = vmatpush1.msra.mxu0 0.0
        %380 = vmatprep.subr.mxu0 0.0
        %381 = vmatpush1.msra.mxu0 0.0
        %382 = vmatprep.subr.mxu0 0.0
        %383 = vmatpush1.msra.mxu0 0.0
        %384 = vmatprep.subr.mxu0 0.0
        %385 = vmatpush1.msra.mxu0 0.0
        %386 = vmatprep.subr.mxu0 0.0
        %387 = vmatpush1.msra.mxu0 0.0
        %388 = vmatprep.mubr.f32.mxu0 0.0
        %389 = vmatmul.mubr.f32.gmra.mrb[0].mxu0 %v301
        %v390 = vpop.f32.mrb[0].mxu0
        %v391 = vadd.f32 0.0, %v390
        %v392 = vpop.f32.mrb[0].mxu0
        %393 = vmatprep.mubr.f32.mxu0 0.0
        %394 = vmatmul.mubr.f32.gmra.mrb[0].mxu0 %v304
        %v395 = vpop.f32.mrb[0].mxu0
        %v396 = vadd.f32 0.0, %v395
        %v397 = vpop.f32.mrb[0].mxu0
        %398 = vmatprep.mubr.f32.mxu0 0.0
        %399 = vmatmul.mubr.f32.gmra.mrb[0].mxu0 %v307
        %v400 = vpop.f32.mrb[0].mxu0
        %v401 = vadd.f32 0.0, %v400
        %v402 = vpop.f32.mrb[0].mxu0
        %403 = vmatprep.mubr.f32.mxu0 0.0
        %404 = vmatmul.mubr.f32.gmra.mrb[0].mxu0 %v310
        %v405 = vpop.f32.mrb[0].mxu0
        %v406 = vadd.f32 0.0, %v405
        %v407 = vpop.f32.mrb[0].mxu0
        %408 = vmatprep.mubr.f32.mxu0 0.0
        %409 = vmatmul.mubr.f32.gmra.mrb[0].mxu0 %v313
        %v410 = vpop.f32.mrb[0].mxu0
        %v411 = vadd.f32 0.0, %v410
        %v412 = vpop.f32.mrb[0].mxu0
        %413 = vmatprep.mubr.f32.mxu0 0.0
        %414 = vmatmul.mubr.f32.gmra.mrb[0].mxu0 %v316
        %v415 = vpop.f32.mrb[0].mxu0
        %v416 = vadd.f32 0.0, %v415
        %v417 = vpop.f32.mrb[0].mxu0
        %418 = vmatprep.mubr.f32.mxu0 0.0
        %419 = vmatmul.mubr.f32.gmra.mrb[0].mxu0 %v319
        %v420 = vpop.f32.mrb[0].mxu0
        %v421 = vadd.f32 0.0, %v420
        %v422 = vpop.f32.mrb[0].mxu0
        %423 = vmatprep.mubr.f32.mxu0 0.0
        %424 = vmatmul.mubr.f32.gmra.mrb[0].mxu0 %v322
        %v425 = vpop.f32.mrb[0].mxu0
        %v426 = vadd.f32 0.0, %v425
        %v427 = vpop.f32.mrb[0].mxu0
        %428 = vdwg.mxu0
        %430 = vset.pattern.permute.xlu0 0
        %431 = vperm.xlu0 %430, %v291
        %v432 = vpop.permute.xlu0 %431
        %435 = vset.pattern.permute.xlu0 0
        %436 = vperm.xlu0 %435, %v292
        %v437 = vpop.permute.xlu0 %436
        %440 = vset.pattern.permute.xlu0 0
        %441 = vperm.xlu0 %440, %v293
        %v442 = vpop.permute.xlu0 %441
        %445 = vset.pattern.permute.xlu0 0
        %446 = vperm.xlu0 %445, %v294
        %v447 = vpop.permute.xlu0 %446
        %450 = vset.pattern.permute.xlu0 0
        %451 = vperm.xlu0 %450, %v295
        %v452 = vpop.permute.xlu0 %451
        %455 = vset.pattern.permute.xlu0 0
        %456 = vperm.xlu0 %455, %v296
        %v457 = vpop.permute.xlu0 %456
        %460 = vset.pattern.permute.xlu0 0
        %461 = vperm.xlu0 %460, %v297
        %v462 = vpop.permute.xlu0 %461
        %465 = vset.pattern.permute.xlu0 0
        %466 = vperm.xlu0 %465, %v298
        %v467 = vpop.permute.xlu0 %466
        %v469 = vsub.f32 %v432, %v391
        %v470 = vsub.f32 %v437, %v396
        %v471 = vsub.f32 %v442, %v401
        %v472 = vsub.f32 %v447, %v406
        %v473 = vsub.f32 %v452, %v411
        %v474 = vsub.f32 %v457, %v416
        %v475 = vsub.f32 %v462, %v421
        %v476 = vsub.f32 %v467, %v426
        %vm477 = vcmask 130048
        %v478 = vsel %vm477, %v469, inf
        %v479 = vsel %vm477, %v470, inf
        %v480 = vsel %vm477, %v471, inf
        %v481 = vsel %vm477, %v472, inf
        %v482 = vsel %vm477, %v473, inf
        %v483 = vmin.f32 %v478, %v482
        %v484 = vsel %vm477, %v474, inf
        %v485 = vmin.f32 %v479, %v484
        %v486 = vsel %vm477, %v475, inf
        %v487 = vmin.f32 %v480, %v486
        %v488 = vsel %vm477, %v476, inf
        %v489 = vmin.f32 %v481, %v488
        %v490 = vmin.f32 %v483, %v485
        %v491 = vmin.f32 %v487, %v489
        %v492 = vmin.f32 %v490, %v491
        %v493 = vrot.slane %v492, 4
        %v494 = vmin.f32 %v492, %v493
        %v495 = vrot.slane %v494, 2
        %v496 = vmin.f32 %v494, %v495
        %v497 = vrot.slane %v496, 1
        %v498 = vmin.f32 %v496, %v497
        %v499 = vlaneseq
        %v500 = vshrl.u32 %v499, 7
        %v501 = vadd.s32 %v500, 8
        %v502 = vadd.s32 %v500, 16
        %v503 = vadd.s32 %v500, 24
        %v504 = vadd.s32 %v500, 32
        %v505 = vadd.s32 %v500, 40
        %v506 = vadd.s32 %v500, 48
        %v507 = vadd.s32 %v500, 56
        %vm508 = vcmp.le.f32.partialorder %v469, %v498
        %vm509 = vcmp.le.f32.partialorder %v470, %v498
        %vm510 = vcmp.le.f32.partialorder %v471, %v498
        %vm511 = vcmp.le.f32.partialorder %v472, %v498
        %vm512 = vcmp.le.f32.partialorder %v473, %v498
        %vm513 = vcmp.le.f32.partialorder %v474, %v498
        %vm514 = vcmp.le.f32.partialorder %v475, %v498
        %vm515 = vcmp.le.f32.partialorder %v476, %v498
        %v516 = vsel %vm508, %v500, 64
        %v517 = vsel %vm509, %v501, 64
        %v518 = vsel %vm510, %v502, 64
        %v519 = vsel %vm511, %v503, 64
        %v520 = vsel %vm512, %v504, 64
        %v521 = vsel %vm513, %v505, 64
        %v522 = vsel %vm514, %v506, 64
        %v523 = vsel %vm515, %v507, 64
        %v524 = vsel %vm477, %v516, 2147483647
        %v525 = vsel %vm477, %v517, 2147483647
        %v526 = vsel %vm477, %v518, 2147483647
        %v527 = vsel %vm477, %v519, 2147483647
        %v528 = vsel %vm477, %v520, 2147483647
        %vm529 = vcmp.lt.s32.totalorder %v524, %v528
        %v530 = vsel %vm529, %v524, %v528
        %v531 = vsel %vm477, %v521, 2147483647
        %vm532 = vcmp.lt.s32.totalorder %v525, %v531
        %v533 = vsel %vm532, %v525, %v531
        %v534 = vsel %vm477, %v522, 2147483647
        %vm535 = vcmp.lt.s32.totalorder %v526, %v534
        %v536 = vsel %vm535, %v526, %v534
        %v537 = vsel %vm477, %v523, 2147483647
        %vm538 = vcmp.lt.s32.totalorder %v527, %v537
        %v539 = vsel %vm538, %v527, %v537
        %vm540 = vcmp.lt.s32.totalorder %v530, %v533
        %v541 = vsel %vm540, %v530, %v533
        %vm542 = vcmp.lt.s32.totalorder %v536, %v539
        %v543 = vsel %vm542, %v536, %v539
        %vm544 = vcmp.lt.s32.totalorder %v541, %v543
        %v545 = vsel %vm544, %v541, %v543
        %v546 = vrot.slane %v545, 4
        %vm547 = vcmp.lt.s32.totalorder %v545, %v546
        %v548 = vsel %vm547, %v545, %v546
        %v549 = vrot.slane %v548, 2
        %vm550 = vcmp.lt.s32.totalorder %v548, %v549
        %v551 = vsel %vm550, %v548, %v549
        %v552 = vrot.slane %v551, 1
        %vm553 = vcmp.lt.s32.totalorder %v551, %v552
        %v554 = vsel %vm553, %v551, %v552
        %vm555 = vcmp.eq.s32.totalorder %v500, %v554
        %vm556 = vcmp.eq.s32.totalorder %v501, %v554
        %vm557 = vcmp.eq.s32.totalorder %v502, %v554
        %vm558 = vcmp.eq.s32.totalorder %v503, %v554
        %vm559 = vcmp.eq.s32.totalorder %v504, %v554
        %vm560 = vcmp.eq.s32.totalorder %v505, %v554
        %vm561 = vcmp.eq.s32.totalorder %v506, %v554
        %vm562 = vcmp.eq.s32.totalorder %v507, %v554
        %v563 = vsel %vm555, 1, 0
        %v564 = vsel %vm556, 1, 0
        %v565 = vsel %vm557, 1, 0
        %v566 = vsel %vm558, 1, 0
        %v567 = vsel %vm559, 1, 0
        %v568 = vsel %vm560, 1, 0
        %v569 = vsel %vm561, 1, 0
        %v570 = vsel %vm562, 1, 0
        %v571 = vcvt.s32.f32 %v563
        %v572 = vcvt.s32.f32 %v564
        %v573 = vcvt.s32.f32 %v565
        %v574 = vcvt.s32.f32 %v566
        %v575 = vcvt.s32.f32 %v567
        %v576 = vcvt.s32.f32 %v568
        %v577 = vcvt.s32.f32 %v569
        %v578 = vcvt.s32.f32 %v570
        %579 = vxpose.xlu0.b32.start [1/16] %v283, 128
        %580 = vxpose.xlu0.b32.cont [2/16] %v284, 128
        %581 = vxpose.xlu0.b32.cont [3/16] %v285, 128
        %582 = vxpose.xlu0.b32.cont [4/16] %v286, 128
        %583 = vxpose.xlu0.b32.cont [5/16] %v287, 128
        %584 = vxpose.xlu0.b32.cont [6/16] %v288, 128
        %585 = vxpose.xlu0.b32.cont [7/16] %v289, 128
        %586 = vxpose.xlu0.b32.cont [8/16] %v290, 128
        %587 = vxpose.xlu0.b32.cont [9/16] 0.0, 128
        %588 = vxpose.xlu0.b32.cont [10/16] 0.0, 128
        %589 = vxpose.xlu0.b32.cont [11/16] 0.0, 128
        %590 = vxpose.xlu0.b32.cont [12/16] 0.0, 128
        %591 = vxpose.xlu0.b32.cont [13/16] 0.0, 128
        %592 = vxpose.xlu0.b32.cont [14/16] 0.0, 128
        %593 = vxpose.xlu0.b32.cont [15/16] 0.0, 128
        %594 = vxpose.xlu0.b32.end [16/16] 0.0, 128
        %v595 = vpop.trf.xlu0
        %v596 = vpop.trf.xlu0
        %v597 = vpop.trf.xlu0
        %v598 = vpop.trf.xlu0
        %v599 = vpop.trf.xlu0
        %v600 = vpop.trf.xlu0
        %v601 = vpop.trf.xlu0
        %v602 = vpop.trf.xlu0
        %v603 = vpop.trf.xlu0
        %v604 = vpop.trf.xlu0
        %v605 = vpop.trf.xlu0
        %v606 = vpop.trf.xlu0
        %v607 = vpop.trf.xlu0
        %v608 = vpop.trf.xlu0
        %v609 = vpop.trf.xlu0
        %v610 = vpop.trf.xlu0
        %vm611 = vcmask 523264
        %v613 = vsel %vm611, %v595, 0
        %v616 = vsel %vm611, %v596, 0
        %v619 = vsel %vm611, %v597, 0
        %v622 = vsel %vm611, %v598, 0
        %624 = vmatprep.subr.mxu0 0.0
        %625 = vmatpush1.msra.mxu0 %v571
        %626 = vmatprep.subr.mxu0 0.0
        %627 = vmatpush1.msra.mxu0 %v572
        %628 = vmatprep.subr.mxu0 0.0
        %629 = vmatpush1.msra.mxu0 %v573
        %630 = vmatprep.subr.mxu0 0.0
        %631 = vmatpush1.msra.mxu0 %v574
        %632 = vmatprep.subr.mxu0 0.0
        %633 = vmatpush1.msra.mxu0 %v575
        %634 = vmatprep.subr.mxu0 0.0
        %635 = vmatpush1.msra.mxu0 %v576
        %636 = vmatprep.subr.mxu0 0.0
        %637 = vmatpush1.msra.mxu0 %v577
        %638 = vmatprep.subr.mxu0 0.0
        %639 = vmatpush1.msra.mxu0 %v578
        %640 = vmatprep.subr.mxu0 0.0
        %641 = vmatpush1.msra.mxu0 0.0
        %642 = vmatprep.subr.mxu0 0.0
        %643 = vmatpush1.msra.mxu0 0.0
        %644 = vmatprep.subr.mxu0 0.0
        %645 = vmatpush1.msra.mxu0 0.0
        %646 = vmatprep.subr.mxu0 0.0
        %647 = vmatpush1.msra.mxu0 0.0
        %648 = vmatprep.subr.mxu0 0.0
        %649 = vmatpush1.msra.mxu0 0.0
        %650 = vmatprep.subr.mxu0 0.0
        %651 = vmatpush1.msra.mxu0 0.0
        %652 = vmatprep.subr.mxu0 0.0
        %653 = vmatpush1.msra.mxu0 0.0
        %654 = vmatprep.subr.mxu0 0.0
        %655 = vmatpush1.msra.mxu0 0.0
        %656 = vmatprep.subr.mxu0 0.0
        %657 = vmatpush1.msra.mxu0 0.0
        %658 = vmatprep.subr.mxu0 0.0
        %659 = vmatpush1.msra.mxu0 0.0
        %660 = vmatprep.subr.mxu0 0.0
        %661 = vmatpush1.msra.mxu0 0.0
        %662 = vmatprep.subr.mxu0 0.0
        %663 = vmatpush1.msra.mxu0 0.0
        %664 = vmatprep.subr.mxu0 0.0
        %665 = vmatpush1.msra.mxu0 0.0
        %666 = vmatprep.subr.mxu0 0.0
        %667 = vmatpush1.msra.mxu0 0.0
        %668 = vmatprep.subr.mxu0 0.0
        %669 = vmatpush1.msra.mxu0 0.0
        %670 = vmatprep.subr.mxu0 0.0
        %671 = vmatpush1.msra.mxu0 0.0
        %672 = vmatprep.subr.mxu0 0.0
        %673 = vmatpush1.msra.mxu0 0.0
        %674 = vmatprep.subr.mxu0 0.0
        %675 = vmatpush1.msra.mxu0 0.0
        %676 = vmatprep.subr.mxu0 0.0
        %677 = vmatpush1.msra.mxu0 0.0
        %678 = vmatprep.subr.mxu0 0.0
        %679 = vmatpush1.msra.mxu0 0.0
        %680 = vmatprep.subr.mxu0 0.0
        %681 = vmatpush1.msra.mxu0 0.0
        %682 = vmatprep.subr.mxu0 0.0
        %683 = vmatpush1.msra.mxu0 0.0
        %684 = vmatprep.subr.mxu0 0.0
        %685 = vmatpush1.msra.mxu0 0.0
        %686 = vmatprep.subr.mxu0 0.0
        %687 = vmatpush1.msra.mxu0 0.0
        %688 = vmatprep.mubr.f32.mxu0 0.0
        %689 = vmatmul.mubr.f32.gmra.mrb[0].mxu0 %v613
        %v690 = vpop.f32.mrb[0].mxu0
        %v691 = vadd.f32 0.0, %v690
        %v692 = vpop.f32.mrb[0].mxu0
        %693 = vmatprep.mubr.f32.mxu0 0.0
        %694 = vmatmul.mubr.f32.gmra.mrb[0].mxu0 %v616
        %v695 = vpop.f32.mrb[0].mxu0
        %v696 = vadd.f32 0.0, %v695
        %v697 = vpop.f32.mrb[0].mxu0
        %698 = vmatprep.mubr.f32.mxu0 0.0
        %699 = vmatmul.mubr.f32.gmra.mrb[0].mxu0 %v619
        %v700 = vpop.f32.mrb[0].mxu0
        %v701 = vadd.f32 0.0, %v700
        %v702 = vpop.f32.mrb[0].mxu0
        %703 = vmatprep.mubr.f32.mxu0 0.0
        %704 = vmatmul.mubr.f32.gmra.mrb[0].mxu0 %v622
        %v705 = vpop.f32.mrb[0].mxu0
        %v706 = vadd.f32 0.0, %v705
        %v707 = vpop.f32.mrb[0].mxu0
        %708 = vdwg.mxu0
        %709 = vst.msk [vmem:[%s278] sm:$0xff] %vm477, %v691
        %710 = vst.msk [vmem:[%s278 + $0x8] sm:$0xff] %vm477, %v696
        %711 = vst.msk [vmem:[%s278 + $0x10] sm:$0xff] %vm477, %v701
        %712 = vst.msk [vmem:[%s278 + $0x18] sm:$0xff] %vm477, %v706
        %vm713 = vcmask 122880
        %714 = vst.msk [vmem:[%s256] sm:$0x1] %vm713, %v554
        %v715 = vsub.f32 %v691, %v279
        %v716 = vsub.f32 %v696, %v280
        %v717 = vsub.f32 %v701, %v281
        %v718 = vsub.f32 %v706, %v282
        %v719 = vmul.f32 %v715, %v715
        %v720 = vmul.f32 %v716, %v716
        %v721 = vmul.f32 %v717, %v717
        %v722 = vmul.f32 %v718, %v718
        %v723 = vsel %vm477, %v719, 0.0
        %v724 = vsel %vm477, %v720, 0.0
        %v725 = vadd.f32 %v723, %v724
        %v726 = vsel %vm477, %v721, 0.0
        %v727 = vadd.f32 %v725, %v726
        %v728 = vsel %vm477, %v722, 0.0
        %v729 = vadd.f32 %v727, %v728
        %v730 = vrot.slane %v729, 4
        %v731 = vadd.f32 %v729, %v730
        %v732 = vrot.slane %v731, 2
        %v733 = vadd.f32 %v731, %v732
        %v734 = vrot.slane %v733, 1
        %v735 = vadd.f32 %v733, %v734
        %736 = vst.msk [vmem:[%s262] sm:$0x1] %vm713, %v735
        %p737 = scmp.lt.s32.totalorder %s27, 1
        %s738 = scalar_select %p737, %s27, 1
        %p739 = scmp.lt.s32.totalorder %s28, 0
        %s740 = scalar_select %p739, %s28, 0
        %s741 = smul.addr %s738, 4
        %s742 = sadd.s32 %s740, %s741
        %s743 = smul.addr %s742, 8
        %s744 = scalar_lea.vmem %s3, %s743
        %s745 = sand.u32 %s143, 1
        %s746 = scalar_lea.sflag [#allocation3], %s745
        %s747 = sand.u32 %s143, 1
        %s748 = scalar_lea.vmem [#allocation2], %s747
        %s749 = sand.u32 %s171, 1
        %s750 = scalar_lea.sflag [#allocation5], %s749
        %s751 = sand.u32 %s171, 1
        %s752 = scalar_lea.vmem [#allocation4], %s751
        // Predicated region
        $region33: #{tpu_custom_call.1} parent=31 // pred_check
          %p753 = pneg %p125
        $region34: #{tpu_custom_call.1} parent=31 // pred_check_branch
          %755 = sbr.rel (%p753) target = $region36
        $region35: #{tpu_custom_call.1} parent=31 // pred_region
          _
        $region36: #{tpu_custom_call.1} parent=31 // pred_fallthru
          _
        // Predicated region
        $region37: #{tpu_custom_call.1} parent=31 // pred_check
          %p756 = pneg %p153
        $region38: #{tpu_custom_call.1} parent=31 // pred_check_branch
          %758 = sbr.rel (%p756) target = $region40
        $region39: #{tpu_custom_call.1} parent=31 // pred_region
          %s760 = ssub.s32 16, 16
          %761 = vsyncadd %s746, %s760
          %s762 = sadd.s32 %s28, %s27
          %s763 = smul.addr %s762, 16
          %s764 = scalar_lea.hbm %s4, %s763
          %s766 = sshll.u32 %s748, 4
          %s767 = int_to_ptr.vmem [resolvable:$true] %s766
          %769 = dma.vmem_to_hbm [thread:$0]  %s767, 16, %s764, %s746
        $region40: #{tpu_custom_call.1} parent=31 // pred_fallthru
          _
        // Predicated region
        $region41: #{tpu_custom_call.1} parent=31 // pred_check
          %p770 = pneg %p181
        $region42: #{tpu_custom_call.1} parent=31 // pred_check_branch
          %772 = sbr.rel (%p770) target = $region44
        $region43: #{tpu_custom_call.1} parent=31 // pred_region
          %s774 = ssub.s32 16, 16
          %775 = vsyncadd %s750, %s774
          %s776 = sadd.s32 %s28, %s27
          %s777 = smul.addr %s776, 16
          %s778 = scalar_lea.hbm %s5, %s777
          %s780 = sshll.u32 %s752, 4
          %s781 = int_to_ptr.vmem [resolvable:$true] %s780
          %783 = dma.vmem_to_hbm [thread:$0]  %s781, 16, %s778, %s750
        $region44: #{tpu_custom_call.1} parent=31 // pred_fallthru
          _
      $region32: #{tpu_custom_call.1} parent=5 // pred_fallthru
        _
      %p784 = scmp.le.s32.totalorder 2, %s18
      // Predicated region
      $region45: #{tpu_custom_call.1} parent=5 // pred_check
        %p785 = pneg %p784
      $region46: #{tpu_custom_call.1} parent=5 // pred_check_branch
        %787 = sbr.rel (%p785) target = $region48
      $region47: #{tpu_custom_call.1} parent=5 // pred_region
        %s788 = ssub.s32 %s18, 2
        // Predicated region
        $region49: #{tpu_custom_call.1} parent=47 // pred_check
          %p789 = pneg %p131
        $region50: #{tpu_custom_call.1} parent=47 // pred_check_branch
          %791 = sbr.rel (%p789) target = $region52
        $region51: #{tpu_custom_call.1} parent=47 // pred_region
          %p792 = scmp.lt.s32.totalorder %s29, 1
          %s793 = scalar_select %p792, %s29, 1
          %p794 = scmp.lt.s32.totalorder %s30, 0
          %s795 = scalar_select %p794, %s30, 0
          %s796 = smul.addr %s793, 4
          %s797 = sadd.s32 %s795, %s796
          %s798 = smul.addr %s797, 8
          %s799 = scalar_lea.vmem %s3, %s798
        $region52: #{tpu_custom_call.1} parent=47 // pred_fallthru
          _
        // Predicated region
        $region53: #{tpu_custom_call.1} parent=47 // pred_check
          %p800 = pneg %p159
        $region54: #{tpu_custom_call.1} parent=47 // pred_check_branch
          %802 = sbr.rel (%p800) target = $region56
        $region55: #{tpu_custom_call.1} parent=47 // pred_region
          %s803 = sand.u32 %s144, 1
          %s804 = scalar_lea.sflag [#allocation3], %s803
          %s805 = sand.u32 %s144, 1
          %s806 = scalar_lea.vmem [#allocation2], %s805
          %807 = dma.done %s804, 16
        $region56: #{tpu_custom_call.1} parent=47 // pred_fallthru
          _
        // Predicated region
        $region57: #{tpu_custom_call.1} parent=47 // pred_check
          %p808 = pneg %p187
        $region58: #{tpu_custom_call.1} parent=47 // pred_check_branch
          %810 = sbr.rel (%p808) target = $region60
        $region59: #{tpu_custom_call.1} parent=47 // pred_region
          %s811 = sand.u32 %s172, 1
          %s812 = scalar_lea.sflag [#allocation5], %s811
          %s813 = sand.u32 %s172, 1
          %s814 = scalar_lea.vmem [#allocation4], %s813
          %815 = dma.done %s812, 16
        $region60: #{tpu_custom_call.1} parent=47 // pred_fallthru
          _
      $region48: #{tpu_custom_call.1} parent=5 // pred_fallthru
        _
    $region6: #{tpu_custom_call.1} parent=1 // loop_footer
      %s22 = sadd.s32 1, %s18
    $region7: #{tpu_custom_call.1} parent=1 // loop_footer_branch
      %17 = sbr.rel target = $region3
    $region8: #{tpu_custom_call.1} parent=1 // loop_exit
      _
    %816 = vsyncpa [#allocation3], 1
    %s817 = scalar_lea.sflag [#allocation3], 1
    %818 = vsyncpa %s817, 1
    %819 = vsyncpa [#allocation5], 1
    %s820 = scalar_lea.sflag [#allocation5], 1
    %821 = vsyncpa %s820, 1

</llo_original>
